<compile_context>
chip_gen: v6e
topology: v6e:2x2x1
jax: 0.10.0
libtpu: 0.0.40
codegen_flags: <defaults>
</compile_context>

<pallas_src>
import jax
import jax.numpy as jnp
from jax.experimental import pallas as pl
from jax.experimental.pallas import tpu as pltpu

_LANE = 128
_TARGET_BLOCK_BYTES = 4 * 1024 * 1024    # per in/out buffer; x2 double-buffered -> ~16 MiB
_VMEM_LIMIT_BYTES = 48 * 1024 * 1024     # explicit budget; safe on v5e/v6e/v7x
_MIN_GRID_STEPS = 8                      # keep both v7x TensorCores fed


def _round_up(v, m):
    return ((v + m - 1) // m) * m


def _round_down(v, m):
    return (v // m) * m


def _sublane_align(dtype):
    # 8 rows for 32-bit, 16 for bf16/f16, 32 for int8/fp8 (packed sublanes).
    return max(8, 32 // jnp.dtype(dtype).itemsize)


def _drop_path_kernel(scale_ref, x_ref, o_ref):
    # scale_ref: (tb, 1[, 1]) per-sample scale in x.dtype (0 or 1/keep_prob).
    # x_ref / o_ref: (tb, tn, td) or (tb, tf) sublane/lane-packed block.
    o_ref[...] = x_ref[...] * scale_ref[...]


def _drop_path_3d(x, scale):
    """x: (B, N, D) — operate in place on the native layout (no reshape)."""
    B, N, D = (int(s) for s in x.shape)
    isz = jnp.dtype(x.dtype).itemsize
    sub = _sublane_align(x.dtype)
    target = max(_LANE * sub, _TARGET_BLOCK_BYTES // isz)

    # Lane (minor) tile: full D, or a lane-aligned chunk if a row is huge.
    max_td = _round_down(max(_LANE, target // sub), _LANE)
    td = D if D <= max_td else max_td
    nd = pl.cdiv(D, td)

    # Sublane tile over tokens: full N, or a sublane-aligned chunk.
    rows = max(1, target // td)
    if rows >= N or N <= sub:
        tn = N
    else:
        tn = min(max(sub, _round_down(rows, sub)), _round_down(N, sub))
    nn = pl.cdiv(N, tn)

    # Batch tile: pack several whole samples per block when a sample fits,
    # but keep enough grid steps for megacore load balance.
    if tn == N and nd == 1:
        tb = max(1, min(B, rows // max(N, 1)))
        if pl.cdiv(B, tb) * nn * nd < _MIN_GRID_STEPS:
            tb = max(1, min(tb, pl.cdiv(B, min(B, _MIN_GRID_STEPS))))
    else:
        tb = 1
    nb = pl.cdiv(B, tb)

    return pl.pallas_call(
        _drop_path_kernel,
        out_shape=jax.ShapeDtypeStruct((B, N, D), x.dtype),
        grid=(nb, nn, nd),
        in_specs=[
            pl.BlockSpec((tb, 1, 1), lambda b, n, d: (b, 0, 0)),   # per-sample scale
            pl.BlockSpec((tb, tn, td), lambda b, n, d: (b, n, d)),
        ],
        out_specs=pl.BlockSpec((tb, tn, td), lambda b, n, d: (b, n, d)),
        compiler_params=pltpu.CompilerParams(
            dimension_semantics=("parallel", "parallel", "parallel"),
            vmem_limit_bytes=_VMEM_LIMIT_BYTES,
        ),
    )(scale.reshape(B, 1, 1), x)


def _drop_path_2d(x, scale):
    """x: (B, F) — row-batched blocks with a (tb, 1) per-row scale."""
    B, F = (int(s) for s in x.shape)
    isz = jnp.dtype(x.dtype).itemsize
    sub = _sublane_align(x.dtype)
    target = max(_LANE * sub, _TARGET_BLOCK_BYTES // isz)

    max_tf = _round_down(max(_LANE, target // sub), _LANE)
    tf = F if F <= max_tf else max_tf
    nf = pl.cdiv(F, tf)

    rows = max(1, target // tf)
    if B <= sub:
        tb = B
    else:
        tb = min(max(sub, _round_down(rows, sub)), _round_down(B, sub))
        if pl.cdiv(B, tb) * nf < _MIN_GRID_STEPS:
            want_nb = min(B // sub, pl.cdiv(_MIN_GRID_STEPS, nf))
            tb = min(tb, _round_up(pl.cdiv(B, max(1, want_nb)), sub))
    nb = pl.cdiv(B, tb)

    return pl.pallas_call(
        _drop_path_kernel,
        out_shape=jax.ShapeDtypeStruct((B, F), x.dtype),
        grid=(nb, nf),
        in_specs=[
            pl.BlockSpec((tb, 1), lambda b, f: (b, 0)),            # per-sample scale
            pl.BlockSpec((tb, tf), lambda b, f: (b, f)),
        ],
        out_specs=pl.BlockSpec((tb, tf), lambda b, f: (b, f)),
        compiler_params=pltpu.CompilerParams(
            dimension_semantics=("parallel", "parallel"),
            vmem_limit_bytes=_VMEM_LIMIT_BYTES,
        ),
    )(scale.reshape(B, 1), x)


def drop_path(x, key, drop_prob: float = 0.0, training: bool = False):
    """Pallas implementation of DropPath.forward (training randomness via `key`)."""
    if drop_prob == 0.0 or not training:
        return x

    keep_prob = 1.0 - drop_prob
    B = int(x.shape[0])

    # Per-sample bernoulli(keep_prob), matching torch ordering:
    #   floor(keep_prob + rand) computed in x.dtype; folded with 1/keep_prob
    # into a single per-sample scale so the kernel is one broadcast multiply.
    rand = jax.random.uniform(key, (B,), dtype=x.dtype)
    mask = jnp.floor(jnp.asarray(keep_prob, x.dtype) + rand)
    scale = (mask.astype(jnp.float32) * jnp.float32(1.0 / keep_prob)).astype(x.dtype)

    if x.ndim == 3:
        return _drop_path_3d(x, scale)
    if x.ndim == 2:
        return _drop_path_2d(x, scale)
    if x.ndim == 1:
        return _drop_path_2d(x.reshape(B, 1), scale).reshape(x.shape)

    # ndim >= 4: collapse only the middle dims (keeps the minor dim, so the
    # reshape is layout-friendly), run the 3-D path, restore the shape.
    mid = 1
    for d in x.shape[1:-1]:
        mid *= int(d)
    out = _drop_path_3d(x.reshape(B, mid, int(x.shape[-1])), scale)
    return out.reshape(x.shape)


class DropPath:
    """Minimal JAX analogue of the PyTorch DropPath module."""

    def __init__(self, drop_prob=None):
        self.drop_prob = drop_prob if drop_prob is not None else 0.0
        self.training = True

    def __call__(self, x, key):
        return drop_path(x, key, self.drop_prob, self.training)


if __name__ == "__main__":
    key = jax.random.PRNGKey(0)
    kx, kdrop, kx2, kx3, kx4 = jax.random.split(key, 5)

    module = DropPath(drop_prob=0.25)
    module.training = True

    def reference(x, k, drop_prob):
        kp = 1.0 - drop_prob
        rand = jax.random.uniform(k, (x.shape[0],), dtype=x.dtype)
        m = jnp.floor(jnp.asarray(kp, x.dtype) + rand)
        m = m.reshape((x.shape[0],) + (1,) * (x.ndim - 1))
        return (x / jnp.asarray(kp, x.dtype)) * m

    # 1) ViT-like token tensor: batch=2, seq=8, hidden=32 (native 3-D path).
    x = jax.random.normal(kx, (2, 8, 32), dtype=jnp.float32)
    out = jax.block_until_ready(module(x, kdrop))
    assert out.shape == x.shape
    assert jnp.allclose(out, reference(x, kdrop, module.drop_prob),
                        rtol=1e-5, atol=1e-6), "mismatch vs reference (3-D)"

    # 2) Non-128/8-aligned dims exercise full-extent / ragged-edge blocks.
    x2 = jax.random.normal(kx2, (2, 5, 20), dtype=jnp.float32)
    out2 = jax.block_until_ready(module(x2, kdrop))
    assert jnp.allclose(out2, reference(x2, kdrop, module.drop_prob),
                        rtol=1e-5, atol=1e-6), "mismatch vs reference (ragged 3-D)"

    # 3) 4-D conv-style feature map (middle dims collapsed, batch kept).
    x3 = jax.random.normal(kx3, (2, 4, 16, 16), dtype=jnp.float32)
    out3 = jax.block_until_ready(module(x3, kdrop))
    assert jnp.allclose(out3, reference(x3, kdrop, module.drop_prob),
                        rtol=1e-5, atol=1e-6), "mismatch vs reference (4-D)"

    # 4) 2-D path.
    x4 = jax.random.normal(kx4, (4, 100), dtype=jnp.float32)
    out4 = jax.block_until_ready(module(x4, kdrop))
    assert jnp.allclose(out4, reference(x4, kdrop, module.drop_prob),
                        rtol=1e-5, atol=1e-6), "mismatch vs reference (2-D)"

    # 5) Eval-mode path (identity).
    module.training = False
    out_eval = jax.block_until_ready(module(x, kdrop))
    assert jnp.array_equal(out_eval, x)

    print("KERNEL_OK")
</pallas_src>

<mosaic_0001>
module attributes {stable_mosaic.version = 11 : i64} {
  func.func @_drop_path_kernel(%arg0: i32, %arg1: i32, %arg2: i32, %arg3: memref<1x1x1xf32, #tpu.memory_space<vmem>>, %arg4: memref<1x8x32xf32, #tpu.memory_space<vmem>>, %arg5: memref<1x8x32xf32, #tpu.memory_space<vmem>>) attributes {dimension_semantics = [#tpu.dimension_semantics<parallel>, #tpu.dimension_semantics<parallel>, #tpu.dimension_semantics<parallel>], iteration_bounds = array<i64: 2, 1, 1>, scalar_prefetch = 0 : i64, scratch_operands = 0 : i64, tpu.core_type = #tpu.core_type<tc>, window_params = [{transform_indices = @transform_0, window_bounds = array<i64: 1, 1, 1>}, {transform_indices = @transform_1, window_bounds = array<i64: 1, 8, 32>}, {transform_indices = @transform_2, window_bounds = array<i64: 1, 8, 32>}]} {
    %c0 = arith.constant 0 : index
    %c0_0 = arith.constant 0 : index
    %c0_1 = arith.constant 0 : index
    %0 = vector.load %arg4[%c0, %c0_0, %c0_1] : memref<1x8x32xf32, #tpu.memory_space<vmem>>, vector<1x8x32xf32>
    %c0_2 = arith.constant 0 : index
    %c0_3 = arith.constant 0 : index
    %c0_4 = arith.constant 0 : index
    %1 = vector.load %arg3[%c0_2, %c0_3, %c0_4] : memref<1x1x1xf32, #tpu.memory_space<vmem>>, vector<1x1x1xf32>
    %2 = vector.broadcast %1 : vector<1x1x1xf32> to vector<1x8x32xf32>
    %3 = arith.mulf %0, %2 : vector<1x8x32xf32>
    %c0_5 = arith.constant 0 : index
    %c0_6 = arith.constant 0 : index
    %c0_7 = arith.constant 0 : index
    %4 = vector.load %arg5[%c0_5, %c0_6, %c0_7] : memref<1x8x32xf32, #tpu.memory_space<vmem>>, vector<1x8x32xf32>
    tpu.vector_store %arg5[%c0_5, %c0_6, %c0_7], %3 {strides = array<i32>} : memref<1x8x32xf32, #tpu.memory_space<vmem>>, vector<1x8x32xf32>,
    return
  }
  func.func @transform_0(%arg0: i32, %arg1: i32, %arg2: i32) -> (i32, i32, i32) {
    %c0_i32 = arith.constant 0 : i32
    %c0_i32_0 = arith.constant 0 : i32
    %c0_i32_1 = arith.constant 0 : i32
    return %arg0, %c0_i32, %c0_i32_0 : i32, i32, i32
  }
  func.func @transform_1(%arg0: i32, %arg1: i32, %arg2: i32) -> (i32, i32, i32) {
    %c0_i32 = arith.constant 0 : i32
    return %arg0, %arg1, %arg2 : i32, i32, i32
  }
  func.func @transform_2(%arg0: i32, %arg1: i32, %arg2: i32) -> (i32, i32, i32) {
    %c0_i32 = arith.constant 0 : i32
    return %arg0, %arg1, %arg2 : i32, i32, i32
  }
}

</mosaic_0001>

<llo_original>
// kernel: tpu_custom_call.1
$region0: #{tpu_custom_call.1}
  #allocation0 [shape = 'u32[]', space=smem, size = 0x4, offset = 0x4, fixed_abs, tag = 'smem constant byte address 0x4 - core index']
  #allocation1 [shape = 'u32[144,128]{1,0:T(1,128)}', space=vmem, size = 0x12000, scoped, tag = 'internal scratch']
  %s0 = inlined_call_operand.vmem [shape: f32[2,1,1], index: 0, kind: input, shape index: {}]
  %s1 = inlined_call_operand.hbm [shape: f32[2,8,32], index: 1, kind: input, shape index: {}]
  %s2 = inlined_call_operand.hbm [shape: f32[2,8,32], index: 2, kind: output, shape index: {}]
  %s3 = sld [smem:[#allocation0]]
  $region45: #{tpu_custom_call.1} parent=0
    _
  %s5 = ssub.s32 1, %s3
  %s6 = scalar_select 0, %s5, %s3
  $region1: #{tpu_custom_call.1} parent=0
    #allocation2 [shape = 'u8[8192]{0}', space=vmem, size = 0x2000, scoped, tag = 'input window, operand 1']
    #allocation3 [shape = 's32[2]{0}', space=sflag, size = 0x8, scoped, tag = 'scoped memory for tpu_custom_call.1']
    #allocation4 [shape = 's32[2]{0}', space=sflag, size = 0x8, scoped, tag = 'scoped memory for tpu_custom_call.1']
    #allocation5 [shape = 'u8[8192]{0}', space=vmem, size = 0x2000, scoped, tag = 'output window, operand 0']
    %7 = vsyncpa [#allocation3], 0
    %s8 = scalar_lea.sflag [#allocation3], 1
    %9 = vsyncpa %s8, 0
    %10 = vsyncpa [#allocation4], 0
    %s11 = scalar_lea.sflag [#allocation4], 1
    %12 = vsyncpa %s11, 0
    loop: start=0, step=1, limit=4
    $region2: #{tpu_custom_call.1} parent=1 // loop_pre_header
      _
    $region3: #{tpu_custom_call.1} parent=1 // loop_header
      %s14 = sphi 0, %s18
      %p15 = scmp.ge.s32.totalorder %s14, 4
      %s21 = sphi 0, %s40
      %s22 = sphi 0, %s36
      %s23 = sphi 0, %s32
      %s24 = sphi 0, %s21
      %s25 = sphi 0, %s22
      %s26 = sphi 0, %s23
      %s27 = sphi 0, %s24
      %s28 = sphi 0, %s25
      %s29 = sphi 0, %s26
      %s43 = sphi 0, %s45
      %s46 = sphi 0, %s43
      %s47 = sphi 0, %s46
      %s63 = sphi 0, %s47
      %s73 = sphi 0, %s75
      %s76 = sphi 0, %s73
      %s77 = sphi 0, %s76
      %s93 = sphi 0, %s77
      %s103 = sphi 0, %s105
      %s106 = sphi 0, %s103
      %s107 = sphi 0, %s106
      %s123 = sphi 0, %s107
    $region4: #{tpu_custom_call.1} parent=1 // loop_header_branch
      %17 = sbr.rel (%p15) target = $region8
    $region5: #{tpu_custom_call.1} parent=1 // loop_body
      %s19 = ssub.s32 %s14, 1
      %s20 = ssub.s32 %s14, 2
      %s30 = sadd.s32 1, %s23
      %p31 = scmp.ge.s32.totalorder %s30, 1
      %s32 = scalar_select %p31, 0, %s30
      %s33 = sadd.s32 1, %s22
      %s34 = scalar_select %p31, %s33, %s22
      %p35 = scmp.ge.s32.totalorder %s34, 1
      %s36 = scalar_select %p35, 0, %s34
      %s37 = sadd.s32 1, %s21
      %s38 = scalar_select %p35, %s37, %s21
      %p39 = scmp.ge.s32.totalorder %s38, 2
      %s40 = scalar_select %p39, 0, %s38
      %s41 = ssub.s32 %s21, %s40
      %p42 = scmp.eq.s32.totalorder %s41, 0
      %s44 = sadd.s32 %s43, 1
      %s45 = scalar_select %p42, %s43, %s44
      %p48 = pneg %p42
      %p49 = scmp.eq.s32.totalorder %s14, 1
      %p50 = por %p48, %p49
      %p51 = scmp.ne.s32.totalorder %s43, %s46
      %p52 = scmp.eq.s32.totalorder %s14, 0
      %p53 = por %p51, %p52
      %p54 = scmp.ne.s32.totalorder %s43, %s46
      %p55 = scmp.eq.s32.totalorder %s19, 1
      %p56 = por %p54, %p55
      %p57 = scmp.ne.s32.totalorder %s46, %s47
      %p58 = scmp.eq.s32.totalorder %s19, 0
      %p59 = por %p57, %p58
      %p60 = scmp.ne.s32.totalorder %s46, %s47
      %p61 = scmp.eq.s32.totalorder %s20, 1
      %p62 = por %p60, %p61
      %p64 = scmp.ne.s32.totalorder %s47, %s63
      %p65 = scmp.eq.s32.totalorder %s20, 0
      %p66 = por %p64, %p65
      %s67 = ssub.s32 %s21, %s40
      %s68 = ssub.s32 %s22, %s36
      %s69 = sor.u32 %s67, %s68
      %s70 = ssub.s32 %s23, %s32
      %s71 = sor.u32 %s69, %s70
      %p72 = scmp.eq.s32.totalorder %s71, 0
      %s74 = sadd.s32 %s73, 1
      %s75 = scalar_select %p72, %s73, %s74
      %p78 = pneg %p72
      %p79 = scmp.eq.s32.totalorder %s14, 1
      %p80 = por %p78, %p79
      %p81 = scmp.ne.s32.totalorder %s73, %s76
      %p82 = scmp.eq.s32.totalorder %s14, 0
      %p83 = por %p81, %p82
      %p84 = scmp.ne.s32.totalorder %s73, %s76
      %p85 = scmp.eq.s32.totalorder %s19, 1
      %p86 = por %p84, %p85
      %p87 = scmp.ne.s32.totalorder %s76, %s77
      %p88 = scmp.eq.s32.totalorder %s19, 0
      %p89 = por %p87, %p88
      %p90 = scmp.ne.s32.totalorder %s76, %s77
      %p91 = scmp.eq.s32.totalorder %s20, 1
      %p92 = por %p90, %p91
      %p94 = scmp.ne.s32.totalorder %s77, %s93
      %p95 = scmp.eq.s32.totalorder %s20, 0
      %p96 = por %p94, %p95
      %s97 = ssub.s32 %s21, %s40
      %s98 = ssub.s32 %s22, %s36
      %s99 = sor.u32 %s97, %s98
      %s100 = ssub.s32 %s23, %s32
      %s101 = sor.u32 %s99, %s100
      %p102 = scmp.eq.s32.totalorder %s101, 0
      %s104 = sadd.s32 %s103, 1
      %s105 = scalar_select %p102, %s103, %s104
      %p108 = pneg %p102
      %p109 = scmp.eq.s32.totalorder %s14, 1
      %p110 = por %p108, %p109
      %p111 = scmp.ne.s32.totalorder %s103, %s106
      %p112 = scmp.eq.s32.totalorder %s14, 0
      %p113 = por %p111, %p112
      %p114 = scmp.ne.s32.totalorder %s103, %s106
      %p115 = scmp.eq.s32.totalorder %s19, 1
      %p116 = por %p114, %p115
      %p117 = scmp.ne.s32.totalorder %s106, %s107
      %p118 = scmp.eq.s32.totalorder %s19, 0
      %p119 = por %p117, %p118
      %p120 = scmp.ne.s32.totalorder %s106, %s107
      %p121 = scmp.eq.s32.totalorder %s20, 1
      %p122 = por %p120, %p121
      %p124 = scmp.ne.s32.totalorder %s107, %s123
      %p125 = scmp.eq.s32.totalorder %s20, 0
      %p126 = por %p124, %p125
      %p127 = scmp.le.s32.totalorder 1, %s14
      %p128 = scmp.lt.s32.totalorder %s14, 3
      %p129 = pnand %p127, %p128
      %p130 = pneg %p129
      // Predicated region
      $region9: #{tpu_custom_call.1} parent=5 // pred_check
        _
      $region10: #{tpu_custom_call.1} parent=5 // pred_check_branch
        %132 = sbr.rel (%p129) target = $region12
      $region11: #{tpu_custom_call.1} parent=5 // pred_region
        %s133 = ssub.s32 %s14, 1
      $region12: #{tpu_custom_call.1} parent=5 // pred_fallthru
        _
      %p134 = scmp.lt.s32.totalorder %s14, 2
      // Predicated region
      $region13: #{tpu_custom_call.1} parent=5 // pred_check
        %p135 = pneg %p134
      $region14: #{tpu_custom_call.1} parent=5 // pred_check_branch
        %137 = sbr.rel (%p135) target = $region16
      $region15: #{tpu_custom_call.1} parent=5 // pred_region
        // Predicated region
        $region17: #{tpu_custom_call.1} parent=15 // pred_check
          %p138 = pneg %p53
        $region18: #{tpu_custom_call.1} parent=15 // pred_check_branch
          %140 = sbr.rel (%p138) target = $region20
        $region19: #{tpu_custom_call.1} parent=15 // pred_region
          %p141 = scmp.lt.s32.totalorder %s21, 1
          %s142 = scalar_select %p141, %s21, 1
          %s143 = scalar_lea.vmem %s0, %s142
        $region20: #{tpu_custom_call.1} parent=15 // pred_fallthru
          _
        // Predicated region
        $region21: #{tpu_custom_call.1} parent=15 // pred_check
          %p144 = pneg %p83
        $region22: #{tpu_custom_call.1} parent=15 // pred_check_branch
          %146 = sbr.rel (%p144) target = $region24
        $region23: #{tpu_custom_call.1} parent=15 // pred_region
          %s147 = sand.u32 %s73, 1
          %s148 = scalar_lea.sflag [#allocation3], %s147
          %s149 = sand.u32 %s73, 1
          %s150 = smul.addr %s149, 8
          %s151 = scalar_lea.vmem [#allocation2], %s150
          %s153 = ssub.s32 128, 128
          %154 = vsyncadd %s148, %s153
          %s155 = sadd.s32 %s23, %s22
          %s156 = sadd.s32 %s155, %s21
          %s157 = smul.addr %s156, 128
          %s158 = scalar_lea.hbm %s1, %s157
          %s160 = sshll.u32 %s151, 4
          %s161 = int_to_ptr.vmem [resolvable:$true] %s160
          %163 = dma.hbm_to_vmem [thread:$0]  %s158, 128, %s161, %s148
        $region24: #{tpu_custom_call.1} parent=15 // pred_fallthru
          _
      $region16: #{tpu_custom_call.1} parent=5 // pred_fallthru
        _
      %p164 = scmp.le.s32.totalorder 1, %s14
      %p165 = scmp.lt.s32.totalorder %s14, 3
      %p166 = pnand %p164, %p165
      %p167 = pneg %p166
      // Predicated region
      $region25: #{tpu_custom_call.1} parent=5 // pred_check
        _
      $region26: #{tpu_custom_call.1} parent=5 // pred_check_branch
        %169 = sbr.rel (%p166) target = $region28
      $region27: #{tpu_custom_call.1} parent=5 // pred_region
        %s170 = ssub.s32 %s14, 1
        %s171 = sand.u32 %s76, 1
        %s172 = scalar_lea.sflag [#allocation3], %s171
        %s173 = sand.u32 %s76, 1
        %s174 = smul.addr %s173, 8
        %s175 = scalar_lea.vmem [#allocation2], %s174
        // Predicated region
        $region29: #{tpu_custom_call.1} parent=27 // pred_check
          %p176 = pneg %p89
        $region30: #{tpu_custom_call.1} parent=27 // pred_check_branch
          %178 = sbr.rel (%p176) target = $region32
        $region31: #{tpu_custom_call.1} parent=27 // pred_region
          %179 = dma.done %s172, 128
        $region32: #{tpu_custom_call.1} parent=27 // pred_fallthru
          _
        %p180 = scmp.lt.s32.totalorder %s24, 1
        %s181 = scalar_select %p180, %s24, 1
        %s182 = scalar_lea.vmem %s0, %s181
        %p183 = pneg %p59
        %p184 = pneg %p56
        %s185 = sand.u32 %s76, 1
        %s186 = scalar_lea.sflag [#allocation3], %s185
        %s187 = sand.u32 %s76, 1
        %s188 = smul.addr %s187, 8
        %s189 = scalar_lea.vmem [#allocation2], %s188
        %p190 = pneg %p89
        %p191 = pneg %p86
        %p192 = pneg %p119
        %p193 = pneg %p116
        %s194 = sand.u32 %s106, 1
        %s195 = scalar_lea.sflag [#allocation4], %s194
        %s196 = sand.u32 %s106, 1
        %s197 = smul.addr %s196, 8
        %s198 = scalar_lea.vmem [#allocation5], %s197
        %p199 = scmp.lt.s32.totalorder %s24, 1
        %s200 = scalar_select %p199, %s24, 1
        %s201 = scalar_lea.vmem %s0, %s200
        %v202 = vld [vmem:[%s175] sm:$0xff]
        %v203 = vld [vmem:[%s201] sm:$0x1]
        %v205 = vlaneseq
        %v206 = vshrl.u32 %v205, 7
        %v207 = vsub.s32 0, %v206
        %v208 = vrot.slane %v203, %v207
        %209 = vset.pattern.permute.xlu0 0
        %210 = vperm.xlu0 %209, %v208
        %v211 = vpop.permute.xlu0 %210
        %v213 = vmul.f32 %v202, %v211
        %vm214 = vcmask 261120
        %215 = vst.msk [vmem:[%s198] sm:$0xff] %vm214, %v213
        %s216 = sand.u32 %s106, 1
        %s217 = scalar_lea.sflag [#allocation4], %s216
        %s218 = sand.u32 %s106, 1
        %s219 = smul.addr %s218, 8
        %s220 = scalar_lea.vmem [#allocation5], %s219
        // Predicated region
        $region33: #{tpu_custom_call.1} parent=27 // pred_check
          %p221 = pneg %p116
        $region34: #{tpu_custom_call.1} parent=27 // pred_check_branch
          %223 = sbr.rel (%p221) target = $region36
        $region35: #{tpu_custom_call.1} parent=27 // pred_region
          %s225 = ssub.s32 128, 128
          %226 = vsyncadd %s217, %s225
          %s227 = sadd.s32 %s26, %s25
          %s228 = sadd.s32 %s227, %s24
          %s229 = smul.addr %s228, 128
          %s230 = scalar_lea.hbm %s2, %s229
          %s232 = sshll.u32 %s220, 4
          %s233 = int_to_ptr.vmem [resolvable:$true] %s232
          %235 = dma.vmem_to_hbm [thread:$0]  %s233, 128, %s230, %s217
        $region36: #{tpu_custom_call.1} parent=27 // pred_fallthru
          _
      $region28: #{tpu_custom_call.1} parent=5 // pred_fallthru
        _
      %p236 = scmp.le.s32.totalorder 2, %s14
      // Predicated region
      $region37: #{tpu_custom_call.1} parent=5 // pred_check
        %p237 = pneg %p236
      $region38: #{tpu_custom_call.1} parent=5 // pred_check_branch
        %239 = sbr.rel (%p237) target = $region40
      $region39: #{tpu_custom_call.1} parent=5 // pred_region
        %s240 = ssub.s32 %s14, 2
        // Predicated region
        $region41: #{tpu_custom_call.1} parent=39 // pred_check
          %p241 = pneg %p122
        $region42: #{tpu_custom_call.1} parent=39 // pred_check_branch
          %243 = sbr.rel (%p241) target = $region44
        $region43: #{tpu_custom_call.1} parent=39 // pred_region
          %s244 = sand.u32 %s107, 1
          %s245 = scalar_lea.sflag [#allocation4], %s244
          %s246 = sand.u32 %s107, 1
          %s247 = smul.addr %s246, 8
          %s248 = scalar_lea.vmem [#allocation5], %s247
          %249 = dma.done %s245, 128
        $region44: #{tpu_custom_call.1} parent=39 // pred_fallthru
          _
      $region40: #{tpu_custom_call.1} parent=5 // pred_fallthru
        _
    $region6: #{tpu_custom_call.1} parent=1 // loop_footer
      %s18 = sadd.s32 1, %s14
    $region7: #{tpu_custom_call.1} parent=1 // loop_footer_branch
      %13 = sbr.rel target = $region3
    $region8: #{tpu_custom_call.1} parent=1 // loop_exit
      _
    %250 = vsyncpa [#allocation3], 1
    %s251 = scalar_lea.sflag [#allocation3], 1
    %252 = vsyncpa %s251, 1
    %253 = vsyncpa [#allocation4], 1
    %s254 = scalar_lea.sflag [#allocation4], 1
    %255 = vsyncpa %s254, 1

</llo_original>
